<compile_context>
chip_gen: v7x
topology: tpu7x:2x2x1
jax: 0.10.0
libtpu: 0.0.40
codegen_flags: <defaults>
</compile_context>

<pallas_src>
import functools
import math

import jax
import jax.numpy as jnp
from jax.experimental import pallas as pl
from jax.experimental.pallas import tpu as pltpu

HIDDEN = 256
PAD_OUT = 128  # lane-dense padded output width (multiple of 128)


def _mlp_kernel(x_ref, w1_ref, b1_ref, w2_ref, b2_ref, o_ref):
    # Layer 1: bf16 operands on the MXU, fp32 accumulate.
    x = x_ref[...].astype(jnp.bfloat16)                              # (B, num_inputs)
    h = jnp.dot(x, w1_ref[...], preferred_element_type=jnp.float32)  # (B, 256) f32
    # Bias + ReLU epilogue in fp32 (VPU); single tile-level add, no per-step re-broadcast.
    h = jnp.maximum(h + b1_ref[...], 0.0)
    # Layer 2: bf16 operands, fp32 accumulate, lane-dense (B, 128) output tile.
    y = jnp.dot(h.astype(jnp.bfloat16), w2_ref[...],
                preferred_element_type=jnp.float32)                  # (B, 128) f32
    o_ref[...] = (y + b2_ref[...]).astype(o_ref.dtype)


@functools.partial(jax.jit, static_argnames=("num_outputs", "batch_tile"))
def net_forward(x, w1, b1, w2p, b2p, *, num_outputs, batch_tile=512):
    """Forward pass of Net. w2p/b2p are zero-padded to PAD_OUT lanes; result is sliced."""
    batch, num_inputs = x.shape
    padded_out = w2p.shape[1]

    if batch > batch_tile and batch % batch_tile == 0:
        # Tile only the batch dimension; weights/biases stay resident in VMEM every step.
        y_pad = pl.pallas_call(
            _mlp_kernel,
            out_shape=jax.ShapeDtypeStruct((batch, padded_out), jnp.float32),
            grid=(batch // batch_tile,),
            in_specs=[
                pl.BlockSpec((batch_tile, num_inputs), lambda i: (i, 0)),
                pl.BlockSpec(w1.shape, lambda i: (0, 0)),
                pl.BlockSpec(b1.shape, lambda i: (0, 0)),
                pl.BlockSpec(w2p.shape, lambda i: (0, 0)),
                pl.BlockSpec(b2p.shape, lambda i: (0, 0)),
            ],
            out_specs=pl.BlockSpec((batch_tile, padded_out), lambda i: (i, 0)),
            compiler_params=pltpu.CompilerParams(
                dimension_semantics=("parallel",)),
        )(x, w1, b1, w2p, b2p)
    else:
        # Tiny batch: single straight-line invocation, full arrays in VMEM, no grid.
        y_pad = pl.pallas_call(
            _mlp_kernel,
            out_shape=jax.ShapeDtypeStruct((batch, padded_out), jnp.float32),
            in_specs=[pl.BlockSpec(memory_space=pltpu.MemorySpace.VMEM)] * 5,
            out_specs=pl.BlockSpec(memory_space=pltpu.MemorySpace.VMEM),
        )(x, w1, b1, w2p, b2p)

    return y_pad[:, :num_outputs]


def init_net_params(key, num_inputs, num_outputs, hidden=HIDDEN, pad_out=PAD_OUT):
    """PyTorch nn.Linear default init: U(-1/sqrt(fan_in), 1/sqrt(fan_in)).

    Weights stored transposed (in, out) and in bf16 (MXU-native); biases fp32.
    Layer-2 weight/bias are zero-padded to `pad_out` output lanes.
    """
    k1, k2, k3, k4 = jax.random.split(key, 4)
    bound1 = 1.0 / math.sqrt(num_inputs)
    bound2 = 1.0 / math.sqrt(hidden)
    w1 = jax.random.uniform(k1, (num_inputs, hidden), jnp.float32, -bound1, bound1)
    b1 = jax.random.uniform(k2, (1, hidden), jnp.float32, -bound1, bound1)
    w2 = jax.random.uniform(k3, (hidden, num_outputs), jnp.float32, -bound2, bound2)
    b2 = jax.random.uniform(k4, (1, num_outputs), jnp.float32, -bound2, bound2)
    w2p = jnp.zeros((hidden, pad_out), jnp.float32).at[:, :num_outputs].set(w2)
    b2p = jnp.zeros((1, pad_out), jnp.float32).at[:, :num_outputs].set(b2)
    return w1.astype(jnp.bfloat16), b1, w2p.astype(jnp.bfloat16), b2p


if __name__ == "__main__":
    # LunarLander-v2: state dim = 8, num actions = 4 (as the HDQN script implies).
    # TODO(synk): Net.act() epsilon-greedy sampling is host/env-side logic, not a kernel op.
    num_inputs, num_outputs = 8, 4

    key = jax.random.PRNGKey(0)
    kx, kp, kx2 = jax.random.split(key, 3)
    w1, b1, w2p, b2p = init_net_params(kp, num_inputs, num_outputs)

    def ref_forward(x):
        h = jnp.maximum(x @ w1.astype(jnp.float32) + b1, 0.0)
        return h @ w2p[:, :num_outputs].astype(jnp.float32) + b2p[:, :num_outputs]

    # Small batch: exercises the no-grid straight-line path.
    x_small = jax.random.normal(kx, (8, num_inputs), jnp.float32)
    out_small = jax.block_until_ready(
        net_forward(x_small, w1, b1, w2p, b2p, num_outputs=num_outputs))
    assert out_small.shape == (8, num_outputs)
    assert jnp.allclose(out_small, ref_forward(x_small), atol=3e-2, rtol=3e-2)

    # Larger batch: exercises the batch-tiled ("parallel") grid path.
    x_big = jax.random.normal(kx2, (1024, num_inputs), jnp.float32)
    out_big = jax.block_until_ready(
        net_forward(x_big, w1, b1, w2p, b2p, num_outputs=num_outputs))
    assert out_big.shape == (1024, num_outputs)
    assert jnp.allclose(out_big, ref_forward(x_big), atol=3e-2, rtol=3e-2)

    print("KERNEL_OK")
</pallas_src>

<mosaic_0001>
module attributes {stable_mosaic.version = 11 : i64} {
  func.func @_mlp_kernel(%arg0: memref<8x8xf32, #tpu.memory_space<vmem>>, %arg1: memref<8x256xbf16, #tpu.memory_space<vmem>>, %arg2: memref<1x256xf32, #tpu.memory_space<vmem>>, %arg3: memref<256x128xbf16, #tpu.memory_space<vmem>>, %arg4: memref<1x128xf32, #tpu.memory_space<vmem>>, %arg5: memref<8x128xf32, #tpu.memory_space<vmem>>) attributes {dimension_semantics = [], scalar_prefetch = 0 : i64, scratch_operands = 0 : i64, tpu.core_type = #tpu.core_type<tc>} {
    %c0 = arith.constant 0 : index
    %c0_0 = arith.constant 0 : index
    %0 = vector.load %arg0[%c0, %c0_0] : memref<8x8xf32, #tpu.memory_space<vmem>>, vector<8x8xf32>
    %1 = arith.truncf %0 : vector<8x8xf32> to vector<8x8xbf16>
    %c0_1 = arith.constant 0 : index
    %c0_2 = arith.constant 0 : index
    %2 = vector.load %arg1[%c0_1, %c0_2] : memref<8x256xbf16, #tpu.memory_space<vmem>>, vector<8x256xbf16>
    %cst = arith.constant dense<0.000000e+00> : vector<8x256xf32>
    %3 = tpu.matmul %1, %2, %cst {dimension_numbers = #tpu.dot_dimension_numbers<[1], [0], [0], [1], [0, 0, 1, 1], [], []>} : vector<8x8xbf16>, vector<8x256xbf16>, vector<8x256xf32> -> vector<8x256xf32>
    %c0_3 = arith.constant 0 : index
    %c0_4 = arith.constant 0 : index
    %4 = vector.load %arg2[%c0_3, %c0_4] : memref<1x256xf32, #tpu.memory_space<vmem>>, vector<1x256xf32>
    %5 = vector.broadcast %4 : vector<1x256xf32> to vector<8x256xf32>
    %6 = arith.addf %3, %5 : vector<8x256xf32>
    %cst_5 = arith.constant 0.000000e+00 : f32
    %7 = vector.broadcast %cst_5 : f32 to vector<8x256xf32>
    %8 = arith.maximumf %6, %7 : vector<8x256xf32>
    %9 = arith.truncf %8 : vector<8x256xf32> to vector<8x256xbf16>
    %c0_6 = arith.constant 0 : index
    %c0_7 = arith.constant 0 : index
    %10 = vector.load %arg3[%c0_6, %c0_7] : memref<256x128xbf16, #tpu.memory_space<vmem>>, vector<256x128xbf16>
    %cst_8 = arith.constant dense<0.000000e+00> : vector<8x128xf32>
    %11 = tpu.matmul %9, %10, %cst_8 {dimension_numbers = #tpu.dot_dimension_numbers<[1], [0], [0], [1], [0, 0, 1, 1], [], []>} : vector<8x256xbf16>, vector<256x128xbf16>, vector<8x128xf32> -> vector<8x128xf32>
    %c0_9 = arith.constant 0 : index
    %c0_10 = arith.constant 0 : index
    %12 = vector.load %arg4[%c0_9, %c0_10] : memref<1x128xf32, #tpu.memory_space<vmem>>, vector<1x128xf32>
    %13 = vector.broadcast %12 : vector<1x128xf32> to vector<8x128xf32>
    %14 = arith.addf %11, %13 : vector<8x128xf32>
    %c0_11 = arith.constant 0 : index
    %c0_12 = arith.constant 0 : index
    %15 = vector.load %arg5[%c0_11, %c0_12] : memref<8x128xf32, #tpu.memory_space<vmem>>, vector<8x128xf32>
    tpu.vector_store %arg5[%c0_11, %c0_12], %14 {strides = array<i32>} : memref<8x128xf32, #tpu.memory_space<vmem>>, vector<8x128xf32>,
    return
  }
}

</mosaic_0001>

<llo_original>
// kernel: net_forward.1
$region0: #{net_forward.1}
  #allocation0 [shape = 'u32[]', space=smem, size = 0x4, offset = 0x4, fixed_abs, tag = 'smem constant byte address 0x4 - core index']
  #allocation1 [shape = 'u32[144,128]{1,0:T(1,128)}', space=vmem, size = 0x12000, scoped, tag = 'internal scratch']
  %s0 = inlined_call_operand.hbm [shape: f32[8,8], index: 0, kind: input, shape index: {}]
  %s1 = inlined_call_operand.hbm [shape: bf16[8,256], index: 1, kind: input, shape index: {}]
  %s2 = inlined_call_operand.vmem [shape: f32[1,256], index: 2, kind: input, shape index: {}]
  %s3 = inlined_call_operand.hbm [shape: bf16[256,128], index: 3, kind: input, shape index: {}]
  %s4 = inlined_call_operand.vmem [shape: f32[1,128], index: 4, kind: input, shape index: {}]
  %s5 = inlined_call_operand.vmem [shape: f32[8,128], index: 5, kind: output, shape index: {}]
  %s6 = sld [smem:[#allocation0]]
  $region42: #{net_forward.1} parent=0
    _
  %s8 = ssub.s32 1, %s6
  %s9 = scalar_select 0, %s8, %s6
  $region1: #{net_forward.1} parent=0
    #allocation2 [shape = 'u8[4096]{0}', space=vmem, size = 0x1000, scoped, tag = 'input window, operand 0, single buffered']
    #allocation3 [shape = 's32[1]{0}', space=sflag, size = 0x4, scoped, tag = 'scoped memory for net_forward.1']
    #allocation4 [shape = 'u8[4096]{0}', space=vmem, size = 0x1000, scoped, tag = 'input window, operand 1, single buffered']
    #allocation5 [shape = 's32[1]{0}', space=sflag, size = 0x4, scoped, tag = 'scoped memory for net_forward.1']
    #allocation6 [shape = 'u8[65536]{0}', space=vmem, size = 0x10000, scoped, tag = 'input window, operand 3, single buffered']
    %10 = vsyncpa [#allocation3], 0
    %11 = vsyncpa [#allocation5], 0
    // Predicated region
    $region2: #{net_forward.1} parent=1 // pred_check
      _
    $region3: #{net_forward.1} parent=1 // pred_check_branch
      %13 = sbr.rel (0) target = $region5
    $region4: #{net_forward.1} parent=1 // pred_region
      %s15 = ssub.s32 128, 128
      %16 = vsyncadd [#allocation3], %s15
      %s18 = sshll.u32 [#allocation2], 4
      %s19 = int_to_ptr.vmem [resolvable:$true] %s18
      %21 = dma.hbm_to_vmem [thread:$0]  %s0, 128, %s19, [#allocation3]
    $region5: #{net_forward.1} parent=1 // pred_fallthru
      _
    // Predicated region
    $region6: #{net_forward.1} parent=1 // pred_check
      _
    $region7: #{net_forward.1} parent=1 // pred_check_branch
      %23 = sbr.rel (0) target = $region9
    $region8: #{net_forward.1} parent=1 // pred_region
      %s25 = ssub.s32 128, 128
      %26 = vsyncadd [#allocation5], %s25
      %s28 = sshll.u32 [#allocation4], 4
      %s29 = int_to_ptr.vmem [resolvable:$true] %s28
      %31 = dma.hbm_to_vmem [thread:$0]  %s1, 128, %s29, [#allocation5]
    $region9: #{net_forward.1} parent=1 // pred_fallthru
      _
    // Predicated region
    $region10: #{net_forward.1} parent=1 // pred_check
      _
    $region11: #{net_forward.1} parent=1 // pred_check_branch
      %33 = sbr.rel (0) target = $region13
    $region12: #{net_forward.1} parent=1 // pred_region
      _
    $region13: #{net_forward.1} parent=1 // pred_fallthru
      _
    // Predicated region
    $region14: #{net_forward.1} parent=1 // pred_check
      _
    $region15: #{net_forward.1} parent=1 // pred_check_branch
      %35 = sbr.rel (0) target = $region17
    $region16: #{net_forward.1} parent=1 // pred_region
      %s37 = ssub.s32 2048, 2048
      %38 = vsyncadd [#allocation5], %s37
      %s39 = sshll.u32 [#allocation6], 4
      %s40 = int_to_ptr.vmem [resolvable:$true] %s39
      %45 = dma.hbm_to_vmem [thread:$0]  %s3, 2048, %s40, [#allocation5], 64, 64, 4
    $region17: #{net_forward.1} parent=1 // pred_fallthru
      _
    // Predicated region
    $region18: #{net_forward.1} parent=1 // pred_check
      _
    $region19: #{net_forward.1} parent=1 // pred_check_branch
      %47 = sbr.rel (0) target = $region21
    $region20: #{net_forward.1} parent=1 // pred_region
      _
    $region21: #{net_forward.1} parent=1 // pred_fallthru
      _
    // Predicated region
    $region22: #{net_forward.1} parent=1 // pred_check
      _
    $region23: #{net_forward.1} parent=1 // pred_check_branch
      %49 = sbr.rel (0) target = $region25
    $region24: #{net_forward.1} parent=1 // pred_region
      %50 = dma.done [#allocation3], 128
    $region25: #{net_forward.1} parent=1 // pred_fallthru
      _
    // Predicated region
    $region26: #{net_forward.1} parent=1 // pred_check
      _
    $region27: #{net_forward.1} parent=1 // pred_check_branch
      %52 = sbr.rel (0) target = $region29
    $region28: #{net_forward.1} parent=1 // pred_region
      %53 = dma.done [#allocation5], 128
    $region29: #{net_forward.1} parent=1 // pred_fallthru
      _
    // Predicated region
    $region30: #{net_forward.1} parent=1 // pred_check
      _
    $region31: #{net_forward.1} parent=1 // pred_check_branch
      %55 = sbr.rel (0) target = $region33
    $region32: #{net_forward.1} parent=1 // pred_region
      %56 = dma.done [#allocation5], 2048
    $region33: #{net_forward.1} parent=1 // pred_fallthru
      _
    %v58 = vld [vmem:[#allocation2] sm:$0xff]
    %v59 = vpack.c.bf16 %v58, %v58
    %v60 = vld [vmem:[#allocation4] sm:$0xff]
    %v61 = vld [vmem:[%s2] sm:$0x3]
    %v63 = vlaneseq
    %v64 = vshrl.u32 %v63, 7
    %v65 = vsub.s32 0, %v64
    %v66 = vrot.slane %v61, %v65
    %v67 = vlaneseq
    %v68 = vshrl.u32 %v67, 7
    %v69 = vsub.s32 1, %v68
    %v70 = vrot.slane %v61, %v69
    %v74 = vunpack.c.l.b16 %v60
    %v75 = vunpack.c.h.b16 %v60
    %v76 = vpack.c.b16 %v74, %v74
    %v77 = vpack.c.b16 %v75, %v75
    %vm78 = vcmask 64512
    %v80 = vsel %vm78, %v59, 0
    %vm82 = vcmask 1043456
    %v84 = vsel %vm82, %v76, 0
    %v87 = vsel %vm82, %v77, 0
    %89 = vmatprep.subr.bf16.mxu0 %v87
    %90 = vmatpush1.bf16.msra.mxu0 %v84
    %91 = vmatprep.subr.bf16.mxu0 0
    %92 = vmatpush1.bf16.msra.mxu0 0
    %93 = vmatprep.subr.bf16.mxu0 0
    %94 = vmatpush1.bf16.msra.mxu0 0
    %95 = vmatprep.subr.bf16.mxu0 0
    %96 = vmatpush1.bf16.msra.mxu0 0
    %97 = vmatprep.subr.bf16.mxu0 0
    %98 = vmatpush1.bf16.msra.mxu0 0
    %99 = vmatprep.subr.bf16.mxu0 0
    %100 = vmatpush1.bf16.msra.mxu0 0
    %101 = vmatprep.subr.bf16.mxu0 0
    %102 = vmatpush1.bf16.msra.mxu0 0
    %103 = vmatprep.subr.bf16.mxu0 0
    %104 = vmatpush1.bf16.msra.mxu0 0
    %105 = vmatprep.subr.bf16.mxu0 0
    %106 = vmatpush1.bf16.msra.mxu0 0
    %107 = vmatprep.subr.bf16.mxu0 0
    %108 = vmatpush1.bf16.msra.mxu0 0
    %109 = vmatprep.subr.bf16.mxu0 0
    %110 = vmatpush1.bf16.msra.mxu0 0
    %111 = vmatprep.subr.bf16.mxu0 0
    %112 = vmatpush1.bf16.msra.mxu0 0
    %113 = vmatprep.subr.bf16.mxu0 0
    %114 = vmatpush1.bf16.msra.mxu0 0
    %115 = vmatprep.subr.bf16.mxu0 0
    %116 = vmatpush1.bf16.msra.mxu0 0
    %117 = vmatprep.subr.bf16.mxu0 0
    %118 = vmatpush1.bf16.msra.mxu0 0
    %119 = vmatprep.subr.bf16.mxu0 0
    %120 = vmatpush1.bf16.msra.mxu0 0
    %121 = vmatprep.mubr.bf16.mxu0 0
    %122 = vmatmul.mubr.bf16.gmra.mrb[0].mxu0 %v80
    %v123 = vpop.f32.mrb[0].mxu0
    %v124 = vadd.f32 %v66, %v123
    %v125 = vpop.f32.mrb[0].mxu0
    %v126 = vadd.f32 %v70, %v125
    %v127 = vpop.f32.mrb[0].mxu0
    %v128 = vpop.f32.mrb[0].mxu0
    %129 = vdwg.mxu0
    %v130 = vmax.f32 %v124, 0.0
    %v131 = vmax.f32 %v126, 0.0
    %v132 = vpack.c.bf16 %v130, %v130
    %v133 = vpack.c.bf16 %v131, %v131
    %v134 = vld [vmem:[#allocation6] sm:$0xf]
    %v135 = vld [vmem:[#allocation6 + $0x4] sm:$0xf]
    %v136 = vld [vmem:[#allocation6 + $0x8] sm:$0xf]
    %v137 = vld [vmem:[#allocation6 + $0xc] sm:$0xf]
    %v138 = vld [vmem:[#allocation6 + $0x10] sm:$0xf]
    %v139 = vld [vmem:[#allocation6 + $0x14] sm:$0xf]
    %v140 = vld [vmem:[#allocation6 + $0x18] sm:$0xf]
    %v141 = vld [vmem:[#allocation6 + $0x1c] sm:$0xf]
    %v142 = vld [vmem:[#allocation6 + $0x20] sm:$0xf]
    %v143 = vld [vmem:[#allocation6 + $0x24] sm:$0xf]
    %v144 = vld [vmem:[#allocation6 + $0x28] sm:$0xf]
    %v145 = vld [vmem:[#allocation6 + $0x2c] sm:$0xf]
    %v146 = vld [vmem:[#allocation6 + $0x30] sm:$0xf]
    %v147 = vld [vmem:[#allocation6 + $0x34] sm:$0xf]
    %v148 = vld [vmem:[#allocation6 + $0x38] sm:$0xf]
    %v149 = vld [vmem:[#allocation6 + $0x3c] sm:$0xf]
    %v150 = vld [vmem:[#allocation6 + $0x40] sm:$0xf]
    %v151 = vld [vmem:[#allocation6 + $0x44] sm:$0xf]
    %v152 = vld [vmem:[#allocation6 + $0x48] sm:$0xf]
    %v153 = vld [vmem:[#allocation6 + $0x4c] sm:$0xf]
    %v154 = vld [vmem:[#allocation6 + $0x50] sm:$0xf]
    %v155 = vld [vmem:[#allocation6 + $0x54] sm:$0xf]
    %v156 = vld [vmem:[#allocation6 + $0x58] sm:$0xf]
    %v157 = vld [vmem:[#allocation6 + $0x5c] sm:$0xf]
    %v158 = vld [vmem:[#allocation6 + $0x60] sm:$0xf]
    %v159 = vld [vmem:[#allocation6 + $0x64] sm:$0xf]
    %v160 = vld [vmem:[#allocation6 + $0x68] sm:$0xf]
    %v161 = vld [vmem:[#allocation6 + $0x6c] sm:$0xf]
    %v162 = vld [vmem:[#allocation6 + $0x70] sm:$0xf]
    %v163 = vld [vmem:[#allocation6 + $0x74] sm:$0xf]
    %v164 = vld [vmem:[#allocation6 + $0x78] sm:$0xf]
    %v165 = vld [vmem:[#allocation6 + $0x7c] sm:$0xf]
    %v166 = vld [vmem:[%s4] sm:$0x1]
    %v168 = vlaneseq
    %v169 = vshrl.u32 %v168, 7
    %v170 = vsub.s32 0, %v169
    %v171 = vrot.slane %v166, %v170
    %v205 = vunpack.c.l.b16 %v134
    %v206 = vunpack.c.l.b16 %v135
    %v207 = vunpack.c.l.b16 %v136
    %v208 = vunpack.c.l.b16 %v137
    %v209 = vunpack.c.l.b16 %v138
    %v210 = vunpack.c.l.b16 %v139
    %v211 = vunpack.c.l.b16 %v140
    %v212 = vunpack.c.l.b16 %v141
    %v213 = vunpack.c.l.b16 %v142
    %v214 = vunpack.c.l.b16 %v143
    %v215 = vunpack.c.l.b16 %v144
    %v216 = vunpack.c.l.b16 %v145
    %v217 = vunpack.c.l.b16 %v146
    %v218 = vunpack.c.l.b16 %v147
    %v219 = vunpack.c.l.b16 %v148
    %v220 = vunpack.c.l.b16 %v149
    %v221 = vunpack.c.l.b16 %v150
    %v222 = vunpack.c.l.b16 %v151
    %v223 = vunpack.c.l.b16 %v152
    %v224 = vunpack.c.l.b16 %v153
    %v225 = vunpack.c.l.b16 %v154
    %v226 = vunpack.c.l.b16 %v155
    %v227 = vunpack.c.l.b16 %v156
    %v228 = vunpack.c.l.b16 %v157
    %v229 = vunpack.c.l.b16 %v158
    %v230 = vunpack.c.l.b16 %v159
    %v231 = vunpack.c.l.b16 %v160
    %v232 = vunpack.c.l.b16 %v161
    %v233 = vunpack.c.l.b16 %v162
    %v234 = vunpack.c.l.b16 %v163
    %v235 = vunpack.c.l.b16 %v164
    %v236 = vunpack.c.l.b16 %v165
    %v237 = vpack.c.b16 %v206, %v205
    %v238 = vpack.c.b16 %v208, %v207
    %v239 = vpack.c.b16 %v210, %v209
    %v240 = vpack.c.b16 %v212, %v211
    %v241 = vpack.c.b16 %v214, %v213
    %v242 = vpack.c.b16 %v216, %v215
    %v243 = vpack.c.b16 %v218, %v217
    %v244 = vpack.c.b16 %v220, %v219
    %v245 = vpack.c.b16 %v222, %v221
    %v246 = vpack.c.b16 %v224, %v223
    %v247 = vpack.c.b16 %v226, %v225
    %v248 = vpack.c.b16 %v228, %v227
    %v249 = vpack.c.b16 %v230, %v229
    %v250 = vpack.c.b16 %v232, %v231
    %v251 = vpack.c.b16 %v234, %v233
    %v252 = vpack.c.b16 %v236, %v235
    %269 = vmatprep.subr.bf16.mxu0 0
    %270 = vmatpush1.bf16.msra.mxu0 %v237
    %271 = vmatprep.subr.bf16.mxu0 0
    %272 = vmatpush1.bf16.msra.mxu0 %v238
    %273 = vmatprep.subr.bf16.mxu0 0
    %274 = vmatpush1.bf16.msra.mxu0 %v239
    %275 = vmatprep.subr.bf16.mxu0 0
    %276 = vmatpush1.bf16.msra.mxu0 %v240
    %277 = vmatprep.subr.bf16.mxu0 0
    %278 = vmatpush1.bf16.msra.mxu0 %v241
    %279 = vmatprep.subr.bf16.mxu0 0
    %280 = vmatpush1.bf16.msra.mxu0 %v242
    %281 = vmatprep.subr.bf16.mxu0 0
    %282 = vmatpush1.bf16.msra.mxu0 %v243
    %283 = vmatprep.subr.bf16.mxu0 0
    %284 = vmatpush1.bf16.msra.mxu0 %v244
    %285 = vmatprep.subr.bf16.mxu0 0
    %286 = vmatpush1.bf16.msra.mxu0 %v245
    %287 = vmatprep.subr.bf16.mxu0 0
    %288 = vmatpush1.bf16.msra.mxu0 %v246
    %289 = vmatprep.subr.bf16.mxu0 0
    %290 = vmatpush1.bf16.msra.mxu0 %v247
    %291 = vmatprep.subr.bf16.mxu0 0
    %292 = vmatpush1.bf16.msra.mxu0 %v248
    %293 = vmatprep.subr.bf16.mxu0 0
    %294 = vmatpush1.bf16.msra.mxu0 %v249
    %295 = vmatprep.subr.bf16.mxu0 0
    %296 = vmatpush1.bf16.msra.mxu0 %v250
    %297 = vmatprep.subr.bf16.mxu0 0
    %298 = vmatpush1.bf16.msra.mxu0 %v251
    %299 = vmatprep.subr.bf16.mxu0 0
    %300 = vmatpush1.bf16.msra.mxu0 %v252
    %301 = vmatprep.mubr.bf16.mxu0 %v133
    %302 = vmatmul.mubr.bf16.gmra.mrb[0].mxu0 %v132
    %v303 = vpop.f32.mrb[0].mxu0
    %v304 = vadd.f32 %v171, %v303
    %v305 = vpop.f32.mrb[0].mxu0
    %v306 = vpop.f32.mrb[0].mxu0
    %v307 = vpop.f32.mrb[0].mxu0
    %308 = vdwg.mxu0
    %309 = vst [vmem:[%s5] sm:$0xff] %v304
    // Predicated region
    $region34: #{net_forward.1} parent=1 // pred_check
      _
    $region35: #{net_forward.1} parent=1 // pred_check_branch
      %311 = sbr.rel (0) target = $region37
    $region36: #{net_forward.1} parent=1 // pred_region
      _
    $region37: #{net_forward.1} parent=1 // pred_fallthru
      _
    // Predicated region
    $region38: #{net_forward.1} parent=1 // pred_check
      _
    $region39: #{net_forward.1} parent=1 // pred_check_branch
      %313 = sbr.rel (0) target = $region41
    $region40: #{net_forward.1} parent=1 // pred_region
      _
    $region41: #{net_forward.1} parent=1 // pred_fallthru
      _
    %314 = vsyncpa [#allocation3], 1
    %315 = vsyncpa [#allocation5], 1

</llo_original>
